<compile_context>
chip_gen: v5e
topology: v5e:2x2
jax: 0.10.0
libtpu: 0.0.40
codegen_flags: <defaults>
</compile_context>

<pallas_src>
import jax
import jax.numpy as jnp
from jax import lax
from jax.experimental import pallas as pl
from jax.experimental.pallas import tpu as pltpu

EPS = 1e-8


def gcn_weighted_kernel(x_ref, adj_ref, ladj_ref, w_ref, out_ref):
    """One block of Bb graphs per grid step.

    x_ref:   (Bb, N, F_in)
    adj_ref: (Bb, N, N)
    ladj_ref:(N, N)      shared parameter
    w_ref:   (F_in, F_out) shared parameter
    out_ref: (Bb, N, F_out)
    """
    bb, n, f_in = x_ref.shape
    f_out = w_ref.shape[1]

    # support = x @ W, fused across the whole block: one (Bb*N, F_in)@(F_in, F_out)
    # MXU push. N==8 maps exactly onto a sublane group, so the reshape is layout-free.
    support = jnp.dot(
        x_ref[...].reshape(bb * n, f_in), w_ref[...],
        preferred_element_type=jnp.float32,
    ).reshape(bb, n, f_out)

    # Noisy adjacency (the +I self-loop is folded in algebraically below).
    # eps*rand noise omitted: 1e-8 * U[0,1) is below the f32 ulp of O(1) entries.
    a_noise = adj_ref[...] + ladj_ref[...][None]                     # (Bb, N, N)

    # degree of (A_noise + I) = row-sum + 1;  d = (degree + eps)^-1/2  -> (Bb, N, 1)
    degree = jnp.sum(a_noise, axis=2, keepdims=True) + 1.0
    d_inv_sqrt = lax.rsqrt(degree + EPS)

    # out = D^-1/2 (A_noise + I) D^-1/2 @ support
    #     = d * (A_noise @ (d * support) + (d * support))
    s_scaled = d_inv_sqrt * support                                  # (Bb, N, F_out)
    agg = jnp.einsum(
        'bij,bjf->bif', a_noise, s_scaled, preferred_element_type=jnp.float32)
    out_ref[...] = (d_inv_sqrt * (agg + s_scaled)).astype(out_ref.dtype)


def gcn_weighted_layer(x, adj, learnable_adj, weight, block_batch=16):
    """Pallas forward of GCNWeightedLayer.

    x:   (N, F_in) or (B, N, F_in)
    adj: (N, N)    or (B, N, N)
    learnable_adj: (N, N) parameter (shared across the batch)
    weight:        (F_in, F_out) parameter
    """
    squeeze = x.ndim == 2
    if squeeze:
        x = x[None]
        adj = adj[None]
    batch, n, f_in = x.shape
    f_out = weight.shape[1]

    bb = min(block_batch, batch)
    grid = pl.cdiv(batch, bb)
    batch_pad = grid * bb
    if batch_pad != batch:
        pad = batch_pad - batch
        x = jnp.pad(x, ((0, pad), (0, 0), (0, 0)))
        adj = jnp.pad(adj, ((0, pad), (0, 0), (0, 0)))

    out = pl.pallas_call(
        gcn_weighted_kernel,
        out_shape=jax.ShapeDtypeStruct((batch_pad, n, f_out), x.dtype),
        grid=(grid,),
        in_specs=[
            pl.BlockSpec((bb, n, f_in), lambda g: (g, 0, 0)),   # x (per block)
            pl.BlockSpec((bb, n, n), lambda g: (g, 0, 0)),      # adj (per block)
            pl.BlockSpec((n, n), lambda g: (0, 0)),             # learnable_adj (resident)
            pl.BlockSpec((f_in, f_out), lambda g: (0, 0)),      # weight (resident)
        ],
        out_specs=pl.BlockSpec((bb, n, f_out), lambda g: (g, 0, 0)),
        compiler_params=pltpu.CompilerParams(dimension_semantics=("parallel",)),
    )(x, adj, learnable_adj, weight)

    out = out[:batch]
    return out[0] if squeeze else out


def reference_forward(x, adj, learnable_adj, weight):
    # Noise term omitted: eps * U[0,1) added to O(1) entries is below f32 resolution,
    # so it cannot move the output past the 1e-4 tolerance.
    looped = adj + learnable_adj + jnp.eye(adj.shape[0], dtype=adj.dtype)
    degree = jnp.sum(looped, axis=1)
    d_inv_sqrt = jnp.diag(jnp.power(degree + EPS, -0.5))
    normalized = d_inv_sqrt @ looped @ d_inv_sqrt
    return normalized @ (x @ weight)


if __name__ == "__main__":
    # Module hyperparameters (consistent with (num_nodes, in_features) inputs).
    num_assets = 8      # num_nodes
    in_feature = 16
    out_feature = 32
    batch = 32          # many graphs per call; grid=(2,) with block_batch=16

    key = jax.random.PRNGKey(0)
    k_x, k_adj, k_w, k_ladj = jax.random.split(key, 4)

    # Inputs (batched).
    x = jax.random.normal(k_x, (batch, num_assets, in_feature), dtype=jnp.float32)
    adj = jax.random.uniform(k_adj, (batch, num_assets, num_assets), dtype=jnp.float32)

    # Parameters (deterministic init).
    # nn.init.xavier_uniform_: U(-b, b), b = sqrt(6 / (fan_in + fan_out)).
    bound = (6.0 / (in_feature + out_feature)) ** 0.5
    weight = jax.random.uniform(
        k_w, (in_feature, out_feature), dtype=jnp.float32, minval=-bound, maxval=bound)
    # torch.rand(num_assets, num_assets): U[0, 1).
    learnable_adj = jax.random.uniform(
        k_ladj, (num_assets, num_assets), dtype=jnp.float32)

    # Batched run (grid=(2,): coarse blocks, both v7x TCs active).
    out = gcn_weighted_layer(x, adj, learnable_adj, weight, block_batch=16)
    out = jax.block_until_ready(out)
    assert out.shape == (batch, num_assets, out_feature)

    ref = jax.vmap(lambda xb, ab: reference_forward(xb, ab, learnable_adj, weight))(x, adj)
    assert jnp.allclose(out, ref, atol=1e-4, rtol=1e-4), float(jnp.max(jnp.abs(out - ref)))

    # Unbatched path matches the original PyTorch module signature exactly.
    out1 = gcn_weighted_layer(x[0], adj[0], learnable_adj, weight)
    out1 = jax.block_until_ready(out1)
    assert out1.shape == (num_assets, out_feature)
    assert jnp.allclose(out1, ref[0], atol=1e-4, rtol=1e-4)

    # Non-divisible batch exercises the padding path.
    out_odd = gcn_weighted_layer(x[:5], adj[:5], learnable_adj, weight, block_batch=16)
    out_odd = jax.block_until_ready(out_odd)
    assert jnp.allclose(out_odd, ref[:5], atol=1e-4, rtol=1e-4)

    print("KERNEL_OK")
</pallas_src>

<mosaic_0001>
module attributes {stable_mosaic.version = 11 : i64} {
  func.func @gcn_weighted_kernel(%arg0: i32, %arg1: memref<16x8x16xf32, #tpu.memory_space<vmem>>, %arg2: memref<16x8x8xf32, #tpu.memory_space<vmem>>, %arg3: memref<8x8xf32, #tpu.memory_space<vmem>>, %arg4: memref<16x32xf32, #tpu.memory_space<vmem>>, %arg5: memref<16x8x32xf32, #tpu.memory_space<vmem>>) attributes {dimension_semantics = [#tpu.dimension_semantics<parallel>], iteration_bounds = array<i64: 2>, scalar_prefetch = 0 : i64, scratch_operands = 0 : i64, tpu.core_type = #tpu.core_type<tc>, window_params = [{transform_indices = @transform_0, window_bounds = array<i64: 16, 8, 16>}, {transform_indices = @transform_1, window_bounds = array<i64: 16, 8, 8>}, {pipeline_mode = #tpu.pipeline_mode<synchronous>, transform_indices = @transform_2, window_bounds = array<i64: 8, 8>}, {pipeline_mode = #tpu.pipeline_mode<synchronous>, transform_indices = @transform_3, window_bounds = array<i64: 16, 32>}, {transform_indices = @transform_4, window_bounds = array<i64: 16, 8, 32>}]} {
    %c0 = arith.constant 0 : index
    %c0_0 = arith.constant 0 : index
    %c0_1 = arith.constant 0 : index
    %0 = vector.load %arg1[%c0, %c0_0, %c0_1] : memref<16x8x16xf32, #tpu.memory_space<vmem>>, vector<16x8x16xf32>
    %1 = vector.shape_cast %0 : vector<16x8x16xf32> to vector<128x16xf32>
    %c0_2 = arith.constant 0 : index
    %c0_3 = arith.constant 0 : index
    %2 = vector.load %arg4[%c0_2, %c0_3] : memref<16x32xf32, #tpu.memory_space<vmem>>, vector<16x32xf32>
    %cst = arith.constant dense<0.000000e+00> : vector<128x32xf32>
    %3 = tpu.matmul %1, %2, %cst {dimension_numbers = #tpu.dot_dimension_numbers<[1], [0], [0], [1], [0, 0, 1, 1], [], []>} : vector<128x16xf32>, vector<16x32xf32>, vector<128x32xf32> -> vector<128x32xf32>
    %4 = vector.shape_cast %3 : vector<128x32xf32> to vector<16x8x32xf32>
    %c0_4 = arith.constant 0 : index
    %c0_5 = arith.constant 0 : index
    %c0_6 = arith.constant 0 : index
    %5 = vector.load %arg2[%c0_4, %c0_5, %c0_6] : memref<16x8x8xf32, #tpu.memory_space<vmem>>, vector<16x8x8xf32>
    %c0_7 = arith.constant 0 : index
    %c0_8 = arith.constant 0 : index
    %6 = vector.load %arg3[%c0_7, %c0_8] : memref<8x8xf32, #tpu.memory_space<vmem>>, vector<8x8xf32>
    %7 = vector.shape_cast %6 : vector<8x8xf32> to vector<1x8x8xf32>
    %8 = vector.broadcast %7 : vector<1x8x8xf32> to vector<16x8x8xf32>
    %9 = arith.addf %5, %8 : vector<16x8x8xf32>
    %cst_9 = arith.constant dense<0.000000e+00> : vector<16x8xf32>
    %10 = vector.multi_reduction <add>, %9, %cst_9 [2] : vector<16x8x8xf32> to vector<16x8xf32>
    %11 = vector.shape_cast %10 : vector<16x8xf32> to vector<16x8x1xf32>
    %cst_10 = arith.constant 1.000000e+00 : f32
    %12 = vector.broadcast %cst_10 : f32 to vector<16x8x1xf32>
    %13 = arith.addf %11, %12 : vector<16x8x1xf32>
    %cst_11 = arith.constant 9.99999993E-9 : f32
    %14 = vector.broadcast %cst_11 : f32 to vector<16x8x1xf32>
    %15 = arith.addf %13, %14 : vector<16x8x1xf32>
    %16 = math.rsqrt %15 : vector<16x8x1xf32>
    %17 = vector.broadcast %16 : vector<16x8x1xf32> to vector<16x8x32xf32>
    %18 = arith.mulf %17, %4 : vector<16x8x32xf32>
    "tpu.trace_start"() <{level = 10 : i32, message = "bij,bjf->bif"}> : () -> ()
    %cst_12 = arith.constant dense<0.000000e+00> : vector<16x8x32xf32>
    %19 = tpu.matmul %9, %18, %cst_12 {dimension_numbers = #tpu.dot_dimension_numbers<[2], [1], [1], [2], [0, 0, 0, 1, 1, 2], [0], [0]>} : vector<16x8x8xf32>, vector<16x8x32xf32>, vector<16x8x32xf32> -> vector<16x8x32xf32>
    "tpu.trace_stop"() : () -> ()
    %20 = arith.addf %19, %18 : vector<16x8x32xf32>
    %21 = vector.broadcast %16 : vector<16x8x1xf32> to vector<16x8x32xf32>
    %22 = arith.mulf %21, %20 : vector<16x8x32xf32>
    %c0_13 = arith.constant 0 : index
    %c0_14 = arith.constant 0 : index
    %c0_15 = arith.constant 0 : index
    %23 = vector.load %arg5[%c0_13, %c0_14, %c0_15] : memref<16x8x32xf32, #tpu.memory_space<vmem>>, vector<16x8x32xf32>
    tpu.vector_store %arg5[%c0_13, %c0_14, %c0_15], %22 {strides = array<i32>} : memref<16x8x32xf32, #tpu.memory_space<vmem>>, vector<16x8x32xf32>,
    return
  }
  func.func @transform_0(%arg0: i32) -> (i32, i32, i32) {
    %c0_i32 = arith.constant 0 : i32
    %c0_i32_0 = arith.constant 0 : i32
    %c0_i32_1 = arith.constant 0 : i32
    return %arg0, %c0_i32, %c0_i32_0 : i32, i32, i32
  }
  func.func @transform_1(%arg0: i32) -> (i32, i32, i32) {
    %c0_i32 = arith.constant 0 : i32
    %c0_i32_0 = arith.constant 0 : i32
    %c0_i32_1 = arith.constant 0 : i32
    return %arg0, %c0_i32, %c0_i32_0 : i32, i32, i32
  }
  func.func @transform_2(%arg0: i32) -> (i32, i32) {
    %c0_i32 = arith.constant 0 : i32
    %c0_i32_0 = arith.constant 0 : i32
    %c0_i32_1 = arith.constant 0 : i32
    return %c0_i32, %c0_i32_0 : i32, i32
  }
  func.func @transform_3(%arg0: i32) -> (i32, i32) {
    %c0_i32 = arith.constant 0 : i32
    %c0_i32_0 = arith.constant 0 : i32
    %c0_i32_1 = arith.constant 0 : i32
    return %c0_i32, %c0_i32_0 : i32, i32
  }
  func.func @transform_4(%arg0: i32) -> (i32, i32, i32) {
    %c0_i32 = arith.constant 0 : i32
    %c0_i32_0 = arith.constant 0 : i32
    %c0_i32_1 = arith.constant 0 : i32
    return %arg0, %c0_i32, %c0_i32_0 : i32, i32, i32
  }
}

</mosaic_0001>

<llo_original>
// kernel: tpu_custom_call.1
$region0: #{tpu_custom_call.1}
  #allocation0 [shape = 'u32[]', space=smem, size = 0x4, offset = 0x4, fixed_abs, tag = 'smem constant byte address 0x4 - core index']
  #allocation1 [shape = 'u32[72,128]{1,0:T(1,128)}', space=vmem, size = 0x9000, scoped, tag = 'internal scratch']
  %s0 = inlined_call_operand.vmem [shape: f32[32,8,16], index: 0, kind: input, shape index: {}]
  %s1 = inlined_call_operand.vmem [shape: f32[32,8,8], index: 1, kind: input, shape index: {}]
  %s2 = inlined_call_operand.vmem [shape: f32[8,8], index: 2, kind: input, shape index: {}]
  %s3 = inlined_call_operand.vmem [shape: f32[16,32], index: 3, kind: input, shape index: {}]
  %s4 = inlined_call_operand.hbm [shape: f32[32,8,32], index: 4, kind: output, shape index: {}]
  %s5 = sld [smem:[#allocation0]]
  $region49: #{tpu_custom_call.1} parent=0
    _
  %s7 = ssub.s32 1, %s5
  %s8 = scalar_select 0, %s7, %s5
  $region1: #{tpu_custom_call.1} parent=0
    #allocation2 [shape = 'u8[131072]{0}', space=vmem, size = 0x20000, scoped, tag = 'output window, operand 0']
    #allocation3 [shape = 's32[2]{0}', space=sflag, size = 0x8, scoped, tag = 'scoped memory for tpu_custom_call.1']
    %9 = vsyncpa [#allocation3], 0
    %s10 = scalar_lea.sflag [#allocation3], 1
    %11 = vsyncpa %s10, 0
    loop: start=0, step=1, limit=4
    $region2: #{tpu_custom_call.1} parent=1 // loop_pre_header
      _
    $region3: #{tpu_custom_call.1} parent=1 // loop_header
      %s13 = sphi 0, %s17
      %p14 = scmp.ge.s32.totalorder %s13, 4
      %s23 = sphi 0, %s25
      %s26 = sphi 0, %s23
      %s27 = sphi 0, %s26
      %s43 = sphi 0, %s27
      %s49 = sphi 0, %s51
      %s52 = sphi 0, %s49
      %s53 = sphi 0, %s52
      %s69 = sphi 0, %s53
      %s73 = sphi 0, %s73
      %s75 = sphi 0, %s73
      %s76 = sphi 0, %s75
      %s90 = sphi 0, %s76
      %s94 = sphi 0, %s94
      %s96 = sphi 0, %s94
      %s97 = sphi 0, %s96
      %s111 = sphi 0, %s97
      %s117 = sphi 0, %s119
      %s120 = sphi 0, %s117
      %s121 = sphi 0, %s120
      %s137 = sphi 0, %s121
    $region4: #{tpu_custom_call.1} parent=1 // loop_header_branch
      %16 = sbr.rel (%p14) target = $region8
    $region5: #{tpu_custom_call.1} parent=1 // loop_body
      %s18 = ssub.s32 %s13, 1
      %s19 = ssub.s32 %s13, 2
      %s20 = sadd.s32 %s13, 1
      %s21 = ssub.s32 %s13, %s20
      %p22 = scmp.eq.s32.totalorder %s21, 0
      %s24 = sadd.s32 %s23, 1
      %s25 = scalar_select %p22, %s23, %s24
      %p28 = pneg %p22
      %p29 = scmp.eq.s32.totalorder %s13, 1
      %p30 = por %p28, %p29
      %p31 = scmp.ne.s32.totalorder %s23, %s26
      %p32 = scmp.eq.s32.totalorder %s13, 0
      %p33 = por %p31, %p32
      %p34 = scmp.ne.s32.totalorder %s23, %s26
      %p35 = scmp.eq.s32.totalorder %s18, 1
      %p36 = por %p34, %p35
      %p37 = scmp.ne.s32.totalorder %s26, %s27
      %p38 = scmp.eq.s32.totalorder %s18, 0
      %p39 = por %p37, %p38
      %p40 = scmp.ne.s32.totalorder %s26, %s27
      %p41 = scmp.eq.s32.totalorder %s19, 1
      %p42 = por %p40, %p41
      %p44 = scmp.ne.s32.totalorder %s27, %s43
      %p45 = scmp.eq.s32.totalorder %s19, 0
      %p46 = por %p44, %p45
      %s47 = ssub.s32 %s13, %s20
      %p48 = scmp.eq.s32.totalorder %s47, 0
      %s50 = sadd.s32 %s49, 1
      %s51 = scalar_select %p48, %s49, %s50
      %p54 = pneg %p48
      %p55 = scmp.eq.s32.totalorder %s13, 1
      %p56 = por %p54, %p55
      %p57 = scmp.ne.s32.totalorder %s49, %s52
      %p58 = scmp.eq.s32.totalorder %s13, 0
      %p59 = por %p57, %p58
      %p60 = scmp.ne.s32.totalorder %s49, %s52
      %p61 = scmp.eq.s32.totalorder %s18, 1
      %p62 = por %p60, %p61
      %p63 = scmp.ne.s32.totalorder %s52, %s53
      %p64 = scmp.eq.s32.totalorder %s18, 0
      %p65 = por %p63, %p64
      %p66 = scmp.ne.s32.totalorder %s52, %s53
      %p67 = scmp.eq.s32.totalorder %s19, 1
      %p68 = por %p66, %p67
      %p70 = scmp.ne.s32.totalorder %s53, %s69
      %p71 = scmp.eq.s32.totalorder %s19, 0
      %p72 = por %p70, %p71
      %s74 = sadd.s32 %s73, 1
      %p77 = scmp.eq.s32.totalorder %s13, 1
      %p78 = scmp.ne.s32.totalorder %s73, %s75
      %p79 = scmp.eq.s32.totalorder %s13, 0
      %p80 = por %p78, %p79
      %p81 = scmp.ne.s32.totalorder %s73, %s75
      %p82 = scmp.eq.s32.totalorder %s18, 1
      %p83 = por %p81, %p82
      %p84 = scmp.ne.s32.totalorder %s75, %s76
      %p85 = scmp.eq.s32.totalorder %s18, 0
      %p86 = por %p84, %p85
      %p87 = scmp.ne.s32.totalorder %s75, %s76
      %p88 = scmp.eq.s32.totalorder %s19, 1
      %p89 = por %p87, %p88
      %p91 = scmp.ne.s32.totalorder %s76, %s90
      %p92 = scmp.eq.s32.totalorder %s19, 0
      %p93 = por %p91, %p92
      %s95 = sadd.s32 %s94, 1
      %p98 = scmp.eq.s32.totalorder %s13, 1
      %p99 = scmp.ne.s32.totalorder %s94, %s96
      %p100 = scmp.eq.s32.totalorder %s13, 0
      %p101 = por %p99, %p100
      %p102 = scmp.ne.s32.totalorder %s94, %s96
      %p103 = scmp.eq.s32.totalorder %s18, 1
      %p104 = por %p102, %p103
      %p105 = scmp.ne.s32.totalorder %s96, %s97
      %p106 = scmp.eq.s32.totalorder %s18, 0
      %p107 = por %p105, %p106
      %p108 = scmp.ne.s32.totalorder %s96, %s97
      %p109 = scmp.eq.s32.totalorder %s19, 1
      %p110 = por %p108, %p109
      %p112 = scmp.ne.s32.totalorder %s97, %s111
      %p113 = scmp.eq.s32.totalorder %s19, 0
      %p114 = por %p112, %p113
      %s115 = ssub.s32 %s13, %s20
      %p116 = scmp.eq.s32.totalorder %s115, 0
      %s118 = sadd.s32 %s117, 1
      %s119 = scalar_select %p116, %s117, %s118
      %p122 = pneg %p116
      %p123 = scmp.eq.s32.totalorder %s13, 1
      %p124 = por %p122, %p123
      %p125 = scmp.ne.s32.totalorder %s117, %s120
      %p126 = scmp.eq.s32.totalorder %s13, 0
      %p127 = por %p125, %p126
      %p128 = scmp.ne.s32.totalorder %s117, %s120
      %p129 = scmp.eq.s32.totalorder %s18, 1
      %p130 = por %p128, %p129
      %p131 = scmp.ne.s32.totalorder %s120, %s121
      %p132 = scmp.eq.s32.totalorder %s18, 0
      %p133 = por %p131, %p132
      %p134 = scmp.ne.s32.totalorder %s120, %s121
      %p135 = scmp.eq.s32.totalorder %s19, 1
      %p136 = por %p134, %p135
      %p138 = scmp.ne.s32.totalorder %s121, %s137
      %p139 = scmp.eq.s32.totalorder %s19, 0
      %p140 = por %p138, %p139
      %p141 = scmp.le.s32.totalorder 1, %s13
      %p142 = scmp.lt.s32.totalorder %s13, 3
      %p143 = pnand %p141, %p142
      %p144 = pneg %p143
      // Predicated region
      $region9: #{tpu_custom_call.1} parent=5 // pred_check
        _
      $region10: #{tpu_custom_call.1} parent=5 // pred_check_branch
        %146 = sbr.rel (%p143) target = $region12
      $region11: #{tpu_custom_call.1} parent=5 // pred_region
        %s147 = ssub.s32 %s13, 1
        // Predicated region
        $region13: #{tpu_custom_call.1} parent=11 // pred_check
          %p148 = pneg %p86
        $region14: #{tpu_custom_call.1} parent=11 // pred_check_branch
          %150 = sbr.rel (%p148) target = $region16
        $region15: #{tpu_custom_call.1} parent=11 // pred_region
          _
        $region16: #{tpu_custom_call.1} parent=11 // pred_fallthru
          _
        // Predicated region
        $region17: #{tpu_custom_call.1} parent=11 // pred_check
          %p151 = pneg %p107
        $region18: #{tpu_custom_call.1} parent=11 // pred_check_branch
          %153 = sbr.rel (%p151) target = $region20
        $region19: #{tpu_custom_call.1} parent=11 // pred_region
          _
        $region20: #{tpu_custom_call.1} parent=11 // pred_fallthru
          _
      $region12: #{tpu_custom_call.1} parent=5 // pred_fallthru
        _
      %p154 = scmp.lt.s32.totalorder %s13, 2
      // Predicated region
      $region21: #{tpu_custom_call.1} parent=5 // pred_check
        %p155 = pneg %p154
      $region22: #{tpu_custom_call.1} parent=5 // pred_check_branch
        %157 = sbr.rel (%p155) target = $region24
      $region23: #{tpu_custom_call.1} parent=5 // pred_region
        // Predicated region
        $region25: #{tpu_custom_call.1} parent=23 // pred_check
          %p158 = pneg %p33
        $region26: #{tpu_custom_call.1} parent=23 // pred_check_branch
          %160 = sbr.rel (%p158) target = $region28
        $region27: #{tpu_custom_call.1} parent=23 // pred_region
          %s161 = smul.u32 16, %s13
          %p162 = scmp.lt.s32.totalorder %s161, 31
          %s163 = scalar_select %p162, %s161, 31
          %s164 = smul.addr %s163, 8
          %s165 = scalar_lea.vmem %s0, %s164
          %s166 = smul.u32 16, %s13
        $region28: #{tpu_custom_call.1} parent=23 // pred_fallthru
          _
        // Predicated region
        $region29: #{tpu_custom_call.1} parent=23 // pred_check
          %p167 = pneg %p59
        $region30: #{tpu_custom_call.1} parent=23 // pred_check_branch
          %169 = sbr.rel (%p167) target = $region32
        $region31: #{tpu_custom_call.1} parent=23 // pred_region
          %s170 = smul.u32 16, %s13
          %p171 = scmp.lt.s32.totalorder %s170, 31
          %s172 = scalar_select %p171, %s170, 31
          %s173 = smul.addr %s172, 8
          %s174 = scalar_lea.vmem %s1, %s173
          %s175 = smul.u32 16, %s13
        $region32: #{tpu_custom_call.1} parent=23 // pred_fallthru
          _
      $region24: #{tpu_custom_call.1} parent=5 // pred_fallthru
        _
      %p176 = scmp.le.s32.totalorder 1, %s13
      %p177 = scmp.lt.s32.totalorder %s13, 3
      %p178 = pnand %p176, %p177
      %p179 = pneg %p178
      // Predicated region
      $region33: #{tpu_custom_call.1} parent=5 // pred_check
        _
      $region34: #{tpu_custom_call.1} parent=5 // pred_check_branch
        %181 = sbr.rel (%p178) target = $region36
      $region35: #{tpu_custom_call.1} parent=5 // pred_region
        %s182 = ssub.s32 %s13, 1
        %s183 = smul.u32 16, %s18
        %p184 = scmp.lt.s32.totalorder %s183, 31
        %s185 = scalar_select %p184, %s183, 31
        %s186 = smul.addr %s185, 8
        %s187 = scalar_lea.vmem %s0, %s186
        %p188 = pneg %p39
        %p189 = pneg %p36
        %s190 = smul.u32 16, %s18
        %p191 = scmp.lt.s32.totalorder %s190, 31
        %s192 = scalar_select %p191, %s190, 31
        %s193 = smul.addr %s192, 8
        %s194 = scalar_lea.vmem %s1, %s193
        %p195 = pneg %p65
        %p196 = pneg %p62
        %p197 = pneg %p86
        %p198 = pneg %p83
        %p199 = pneg %p107
        %p200 = pneg %p104
        %p201 = pneg %p133
        %p202 = pneg %p130
        %s203 = sand.u32 %s120, 1
        %s204 = scalar_lea.sflag [#allocation3], %s203
        %s205 = sand.u32 %s120, 1
        %s206 = smul.addr %s205, 128
        %s207 = scalar_lea.vmem [#allocation2], %s206
        %s208 = smul.u32 16, %s18
        %p209 = scmp.lt.s32.totalorder %s208, 31
        %s210 = scalar_select %p209, %s208, 31
        %s211 = smul.addr %s210, 8
        %s212 = scalar_lea.vmem %s0, %s211
        %s213 = smul.u32 16, %s18
        %s214 = smul.u32 16, %s18
        %p215 = scmp.lt.s32.totalorder %s214, 31
        %s216 = scalar_select %p215, %s214, 31
        %s217 = smul.addr %s216, 8
        %s218 = scalar_lea.vmem %s1, %s217
        %s219 = smul.u32 16, %s18
        %s220 = smul.u32 16, %s18
        %v221 = vld [vmem:[%s212] sm:$0xff]
        %v222 = vld [vmem:[%s212 + $0x8] sm:$0xff]
        %v223 = vld [vmem:[%s212 + $0x10] sm:$0xff]
        %v224 = vld [vmem:[%s212 + $0x18] sm:$0xff]
        %v225 = vld [vmem:[%s212 + $0x20] sm:$0xff]
        %v226 = vld [vmem:[%s212 + $0x28] sm:$0xff]
        %v227 = vld [vmem:[%s212 + $0x30] sm:$0xff]
        %v228 = vld [vmem:[%s212 + $0x38] sm:$0xff]
        %v229 = vld [vmem:[%s212 + $0x40] sm:$0xff]
        %v230 = vld [vmem:[%s212 + $0x48] sm:$0xff]
        %v231 = vld [vmem:[%s212 + $0x50] sm:$0xff]
        %v232 = vld [vmem:[%s212 + $0x58] sm:$0xff]
        %v233 = vld [vmem:[%s212 + $0x60] sm:$0xff]
        %v234 = vld [vmem:[%s212 + $0x68] sm:$0xff]
        %v235 = vld [vmem:[%s212 + $0x70] sm:$0xff]
        %v236 = vld [vmem:[%s212 + $0x78] sm:$0xff]
        %v237 = vld [vmem:[%s3] sm:$0xff]
        %v238 = vld [vmem:[%s3 + $0x8] sm:$0xff]
        %vm239 = vcmask 130048
        %v241 = vsel %vm239, %v221, 0
        %v244 = vsel %vm239, %v222, 0
        %v247 = vsel %vm239, %v223, 0
        %v250 = vsel %vm239, %v224, 0
        %v253 = vsel %vm239, %v225, 0
        %v256 = vsel %vm239, %v226, 0
        %v259 = vsel %vm239, %v227, 0
        %v262 = vsel %vm239, %v228, 0
        %v265 = vsel %vm239, %v229, 0
        %v268 = vsel %vm239, %v230, 0
        %v271 = vsel %vm239, %v231, 0
        %v274 = vsel %vm239, %v232, 0
        %v277 = vsel %vm239, %v233, 0
        %v280 = vsel %vm239, %v234, 0
        %v283 = vsel %vm239, %v235, 0
        %v286 = vsel %vm239, %v236, 0
        %288 = vmatpush.msra.mxu0 0.0
        %289 = vmatpush.msra.mxu0 0.0
        %290 = vmatpush.msra.mxu0 0.0
        %291 = vmatpush.msra.mxu0 0.0
        %292 = vmatpush.msra.mxu0 0.0
        %293 = vmatpush.msra.mxu0 0.0
        %294 = vmatpush.msra.mxu0 0.0
        %295 = vmatpush.msra.mxu0 0.0
        %296 = vmatpush.msra.mxu0 0.0
        %297 = vmatpush.msra.mxu0 0.0
        %298 = vmatpush.msra.mxu0 0.0
        %299 = vmatpush.msra.mxu0 0.0
        %300 = vmatpush.msra.mxu0 0.0
        %301 = vmatpush.msra.mxu0 0.0
        %302 = vmatpush.msra.mxu0 %v238
        %303 = vmatpush.msra.mxu0 %v237
        %304 = vmatmul.f32.gmra.mxu0 %v241
        %v305 = vpop.f32.mrf.mxu0
        %v306 = vadd.f32 0.0, %v305
        %307 = vmatmul.f32.gmra.mxu0 %v244
        %v308 = vpop.f32.mrf.mxu0
        %v309 = vadd.f32 0.0, %v308
        %310 = vmatmul.f32.gmra.mxu0 %v247
        %v311 = vpop.f32.mrf.mxu0
        %v312 = vadd.f32 0.0, %v311
        %313 = vmatmul.f32.gmra.mxu0 %v250
        %v314 = vpop.f32.mrf.mxu0
        %v315 = vadd.f32 0.0, %v314
        %316 = vmatmul.f32.gmra.mxu0 %v253
        %v317 = vpop.f32.mrf.mxu0
        %v318 = vadd.f32 0.0, %v317
        %319 = vmatmul.f32.gmra.mxu0 %v256
        %v320 = vpop.f32.mrf.mxu0
        %v321 = vadd.f32 0.0, %v320
        %322 = vmatmul.f32.gmra.mxu0 %v259
        %v323 = vpop.f32.mrf.mxu0
        %v324 = vadd.f32 0.0, %v323
        %325 = vmatmul.f32.gmra.mxu0 %v262
        %v326 = vpop.f32.mrf.mxu0
        %v327 = vadd.f32 0.0, %v326
        %328 = vmatmul.f32.gmra.mxu0 %v265
        %v329 = vpop.f32.mrf.mxu0
        %v330 = vadd.f32 0.0, %v329
        %331 = vmatmul.f32.gmra.mxu0 %v268
        %v332 = vpop.f32.mrf.mxu0
        %v333 = vadd.f32 0.0, %v332
        %334 = vmatmul.f32.gmra.mxu0 %v271
        %v335 = vpop.f32.mrf.mxu0
        %v336 = vadd.f32 0.0, %v335
        %337 = vmatmul.f32.gmra.mxu0 %v274
        %v338 = vpop.f32.mrf.mxu0
        %v339 = vadd.f32 0.0, %v338
        %340 = vmatmul.f32.gmra.mxu0 %v277
        %v341 = vpop.f32.mrf.mxu0
        %v342 = vadd.f32 0.0, %v341
        %343 = vmatmul.f32.gmra.mxu0 %v280
        %v344 = vpop.f32.mrf.mxu0
        %v345 = vadd.f32 0.0, %v344
        %346 = vmatmul.f32.gmra.mxu0 %v283
        %v347 = vpop.f32.mrf.mxu0
        %v348 = vadd.f32 0.0, %v347
        %349 = vmatmul.f32.gmra.mxu0 %v286
        %v350 = vpop.f32.mrf.mxu0
        %v351 = vadd.f32 0.0, %v350
        %352 = vdwg.mxu0
        %v353 = vld [vmem:[%s218] sm:$0xff]
        %v354 = vld [vmem:[%s218 + $0x8] sm:$0xff]
        %v355 = vld [vmem:[%s218 + $0x10] sm:$0xff]
        %v356 = vld [vmem:[%s218 + $0x18] sm:$0xff]
        %v357 = vld [vmem:[%s218 + $0x20] sm:$0xff]
        %v358 = vld [vmem:[%s218 + $0x28] sm:$0xff]
        %v359 = vld [vmem:[%s218 + $0x30] sm:$0xff]
        %v360 = vld [vmem:[%s218 + $0x38] sm:$0xff]
        %v361 = vld [vmem:[%s218 + $0x40] sm:$0xff]
        %v362 = vld [vmem:[%s218 + $0x48] sm:$0xff]
        %v363 = vld [vmem:[%s218 + $0x50] sm:$0xff]
        %v364 = vld [vmem:[%s218 + $0x58] sm:$0xff]
        %v365 = vld [vmem:[%s218 + $0x60] sm:$0xff]
        %v366 = vld [vmem:[%s218 + $0x68] sm:$0xff]
        %v367 = vld [vmem:[%s218 + $0x70] sm:$0xff]
        %v368 = vld [vmem:[%s218 + $0x78] sm:$0xff]
        %v369 = vld [vmem:[%s2] sm:$0xff]
        %v370 = vadd.f32 %v353, %v369
        %v371 = vadd.f32 %v354, %v369
        %v372 = vadd.f32 %v355, %v369
        %v373 = vadd.f32 %v356, %v369
        %v374 = vadd.f32 %v357, %v369
        %v375 = vadd.f32 %v358, %v369
        %v376 = vadd.f32 %v359, %v369
        %v377 = vadd.f32 %v360, %v369
        %v378 = vadd.f32 %v361, %v369
        %v379 = vadd.f32 %v362, %v369
        %v380 = vadd.f32 %v363, %v369
        %v381 = vadd.f32 %v364, %v369
        %v382 = vadd.f32 %v365, %v369
        %v383 = vadd.f32 %v366, %v369
        %v384 = vadd.f32 %v367, %v369
        %v385 = vadd.f32 %v368, %v369
        %vm386 = vcmask 64512
        %v387 = vsel %vm386, %v370, 0.0
        %388 = vadd.xlane.f32.xlu0 %v387
        %v389 = vpop.xlane.xlu0 %388
        %v390 = vsel %vm386, %v371, 0.0
        %391 = vadd.xlane.f32.xlu0 %v390
        %v392 = vpop.xlane.xlu0 %391
        %v393 = vsel %vm386, %v372, 0.0
        %394 = vadd.xlane.f32.xlu0 %v393
        %v395 = vpop.xlane.xlu0 %394
        %v396 = vsel %vm386, %v373, 0.0
        %397 = vadd.xlane.f32.xlu0 %v396
        %v398 = vpop.xlane.xlu0 %397
        %v399 = vsel %vm386, %v374, 0.0
        %400 = vadd.xlane.f32.xlu0 %v399
        %v401 = vpop.xlane.xlu0 %400
        %v402 = vsel %vm386, %v375, 0.0
        %403 = vadd.xlane.f32.xlu0 %v402
        %v404 = vpop.xlane.xlu0 %403
        %v405 = vsel %vm386, %v376, 0.0
        %406 = vadd.xlane.f32.xlu0 %v405
        %v407 = vpop.xlane.xlu0 %406
        %v408 = vsel %vm386, %v377, 0.0
        %409 = vadd.xlane.f32.xlu0 %v408
        %v410 = vpop.xlane.xlu0 %409
        %v411 = vsel %vm386, %v378, 0.0
        %412 = vadd.xlane.f32.xlu0 %v411
        %v413 = vpop.xlane.xlu0 %412
        %v414 = vsel %vm386, %v379, 0.0
        %415 = vadd.xlane.f32.xlu0 %v414
        %v416 = vpop.xlane.xlu0 %415
        %v417 = vsel %vm386, %v380, 0.0
        %418 = vadd.xlane.f32.xlu0 %v417
        %v419 = vpop.xlane.xlu0 %418
        %v420 = vsel %vm386, %v381, 0.0
        %421 = vadd.xlane.f32.xlu0 %v420
        %v422 = vpop.xlane.xlu0 %421
        %v423 = vsel %vm386, %v382, 0.0
        %424 = vadd.xlane.f32.xlu0 %v423
        %v425 = vpop.xlane.xlu0 %424
        %v426 = vsel %vm386, %v383, 0.0
        %427 = vadd.xlane.f32.xlu0 %v426
        %v428 = vpop.xlane.xlu0 %427
        %v429 = vsel %vm386, %v384, 0.0
        %430 = vadd.xlane.f32.xlu0 %v429
        %v431 = vpop.xlane.xlu0 %430
        %v432 = vsel %vm386, %v385, 0.0
        %433 = vadd.xlane.f32.xlu0 %v432
        %v434 = vpop.xlane.xlu0 %433
        %v435 = vadd.f32 %v389, 1.0
        %v436 = vadd.f32 %v392, 1.0
        %v437 = vadd.f32 %v395, 1.0
        %v438 = vadd.f32 %v398, 1.0
        %v439 = vadd.f32 %v401, 1.0
        %v440 = vadd.f32 %v404, 1.0
        %v441 = vadd.f32 %v407, 1.0
        %v442 = vadd.f32 %v410, 1.0
        %v443 = vadd.f32 %v413, 1.0
        %v444 = vadd.f32 %v416, 1.0
        %v445 = vadd.f32 %v419, 1.0
        %v446 = vadd.f32 %v422, 1.0
        %v447 = vadd.f32 %v425, 1.0
        %v448 = vadd.f32 %v428, 1.0
        %v449 = vadd.f32 %v431, 1.0
        %v450 = vadd.f32 %v434, 1.0
        %v451 = vadd.f32 %v435, 1e-08
        %v452 = vadd.f32 %v436, 1e-08
        %v453 = vadd.f32 %v437, 1e-08
        %v454 = vadd.f32 %v438, 1e-08
        %v455 = vadd.f32 %v439, 1e-08
        %v456 = vadd.f32 %v440, 1e-08
        %v457 = vadd.f32 %v441, 1e-08
        %v458 = vadd.f32 %v442, 1e-08
        %v459 = vadd.f32 %v443, 1e-08
        %v460 = vadd.f32 %v444, 1e-08
        %v461 = vadd.f32 %v445, 1e-08
        %v462 = vadd.f32 %v446, 1e-08
        %v463 = vadd.f32 %v447, 1e-08
        %v464 = vadd.f32 %v448, 1e-08
        %v465 = vadd.f32 %v449, 1e-08
        %v466 = vadd.f32 %v450, 1e-08
        %v467 = vrsqrt.pop %v451
        %v468 = vmul.f32 %v467, %v451
        %v469 = vmul.f32 %v468, %v467
        %v470 = vmul.f32 0.5, %v469
        %v471 = vsub.f32 1.5, %v470
        %v472 = vmul.f32 %v467, %v471
        %vm473 = vweird.f32 %v451
        %vm474 = vweird.f32 %v467
        %vm475 = vmor %vm473, %vm474
        %v476 = vsel %vm475, %v467, %v472
        %v477 = vrsqrt.pop %v452
        %v478 = vmul.f32 %v477, %v452
        %v479 = vmul.f32 %v478, %v477
        %v480 = vmul.f32 0.5, %v479
        %v481 = vsub.f32 1.5, %v480
        %v482 = vmul.f32 %v477, %v481
        %vm483 = vweird.f32 %v452
        %vm484 = vweird.f32 %v477
        %vm485 = vmor %vm483, %vm484
        %v486 = vsel %vm485, %v477, %v482
        %v487 = vrsqrt.pop %v453
        %v488 = vmul.f32 %v487, %v453
        %v489 = vmul.f32 %v488, %v487
        %v490 = vmul.f32 0.5, %v489
        %v491 = vsub.f32 1.5, %v490
        %v492 = vmul.f32 %v487, %v491
        %vm493 = vweird.f32 %v453
        %vm494 = vweird.f32 %v487
        %vm495 = vmor %vm493, %vm494
        %v496 = vsel %vm495, %v487, %v492
        %v497 = vrsqrt.pop %v454
        %v498 = vmul.f32 %v497, %v454
        %v499 = vmul.f32 %v498, %v497
        %v500 = vmul.f32 0.5, %v499
        %v501 = vsub.f32 1.5, %v500
        %v502 = vmul.f32 %v497, %v501
        %vm503 = vweird.f32 %v454
        %vm504 = vweird.f32 %v497
        %vm505 = vmor %vm503, %vm504
        %v506 = vsel %vm505, %v497, %v502
        %v507 = vrsqrt.pop %v455
        %v508 = vmul.f32 %v507, %v455
        %v509 = vmul.f32 %v508, %v507
        %v510 = vmul.f32 0.5, %v509
        %v511 = vsub.f32 1.5, %v510
        %v512 = vmul.f32 %v507, %v511
        %vm513 = vweird.f32 %v455
        %vm514 = vweird.f32 %v507
        %vm515 = vmor %vm513, %vm514
        %v516 = vsel %vm515, %v507, %v512
        %v517 = vrsqrt.pop %v456
        %v518 = vmul.f32 %v517, %v456
        %v519 = vmul.f32 %v518, %v517
        %v520 = vmul.f32 0.5, %v519
        %v521 = vsub.f32 1.5, %v520
        %v522 = vmul.f32 %v517, %v521
        %vm523 = vweird.f32 %v456
        %vm524 = vweird.f32 %v517
        %vm525 = vmor %vm523, %vm524
        %v526 = vsel %vm525, %v517, %v522
        %v527 = vrsqrt.pop %v457
        %v528 = vmul.f32 %v527, %v457
        %v529 = vmul.f32 %v528, %v527
        %v530 = vmul.f32 0.5, %v529
        %v531 = vsub.f32 1.5, %v530
        %v532 = vmul.f32 %v527, %v531
        %vm533 = vweird.f32 %v457
        %vm534 = vweird.f32 %v527
        %vm535 = vmor %vm533, %vm534
        %v536 = vsel %vm535, %v527, %v532
        %v537 = vrsqrt.pop %v458
        %v538 = vmul.f32 %v537, %v458
        %v539 = vmul.f32 %v538, %v537
        %v540 = vmul.f32 0.5, %v539
        %v541 = vsub.f32 1.5, %v540
        %v542 = vmul.f32 %v537, %v541
        %vm543 = vweird.f32 %v458
        %vm544 = vweird.f32 %v537
        %vm545 = vmor %vm543, %vm544
        %v546 = vsel %vm545, %v537, %v542
        %v547 = vrsqrt.pop %v459
        %v548 = vmul.f32 %v547, %v459
        %v549 = vmul.f32 %v548, %v547
        %v550 = vmul.f32 0.5, %v549
        %v551 = vsub.f32 1.5, %v550
        %v552 = vmul.f32 %v547, %v551
        %vm553 = vweird.f32 %v459
        %vm554 = vweird.f32 %v547
        %vm555 = vmor %vm553, %vm554
        %v556 = vsel %vm555, %v547, %v552
        %v557 = vrsqrt.pop %v460
        %v558 = vmul.f32 %v557, %v460
        %v559 = vmul.f32 %v558, %v557
        %v560 = vmul.f32 0.5, %v559
        %v561 = vsub.f32 1.5, %v560
        %v562 = vmul.f32 %v557, %v561
        %vm563 = vweird.f32 %v460
        %vm564 = vweird.f32 %v557
        %vm565 = vmor %vm563, %vm564
        %v566 = vsel %vm565, %v557, %v562
        %v567 = vrsqrt.pop %v461
        %v568 = vmul.f32 %v567, %v461
        %v569 = vmul.f32 %v568, %v567
        %v570 = vmul.f32 0.5, %v569
        %v571 = vsub.f32 1.5, %v570
        %v572 = vmul.f32 %v567, %v571
        %vm573 = vweird.f32 %v461
        %vm574 = vweird.f32 %v567
        %vm575 = vmor %vm573, %vm574
        %v576 = vsel %vm575, %v567, %v572
        %v577 = vrsqrt.pop %v462
        %v578 = vmul.f32 %v577, %v462
        %v579 = vmul.f32 %v578, %v577
        %v580 = vmul.f32 0.5, %v579
        %v581 = vsub.f32 1.5, %v580
        %v582 = vmul.f32 %v577, %v581
        %vm583 = vweird.f32 %v462
        %vm584 = vweird.f32 %v577
        %vm585 = vmor %vm583, %vm584
        %v586 = vsel %vm585, %v577, %v582
        %v587 = vrsqrt.pop %v463
        %v588 = vmul.f32 %v587, %v463
        %v589 = vmul.f32 %v588, %v587
        %v590 = vmul.f32 0.5, %v589
        %v591 = vsub.f32 1.5, %v590
        %v592 = vmul.f32 %v587, %v591
        %vm593 = vweird.f32 %v463
        %vm594 = vweird.f32 %v587
        %vm595 = vmor %vm593, %vm594
        %v596 = vsel %vm595, %v587, %v592
        %v597 = vrsqrt.pop %v464
        %v598 = vmul.f32 %v597, %v464
        %v599 = vmul.f32 %v598, %v597
        %v600 = vmul.f32 0.5, %v599
        %v601 = vsub.f32 1.5, %v600
        %v602 = vmul.f32 %v597, %v601
        %vm603 = vweird.f32 %v464
        %vm604 = vweird.f32 %v597
        %vm605 = vmor %vm603, %vm604
        %v606 = vsel %vm605, %v597, %v602
        %v607 = vrsqrt.pop %v465
        %v608 = vmul.f32 %v607, %v465
        %v609 = vmul.f32 %v608, %v607
        %v610 = vmul.f32 0.5, %v609
        %v611 = vsub.f32 1.5, %v610
        %v612 = vmul.f32 %v607, %v611
        %vm613 = vweird.f32 %v465
        %vm614 = vweird.f32 %v607
        %vm615 = vmor %vm613, %vm614
        %v616 = vsel %vm615, %v607, %v612
        %v617 = vrsqrt.pop %v466
        %v618 = vmul.f32 %v617, %v466
        %v619 = vmul.f32 %v618, %v617
        %v620 = vmul.f32 0.5, %v619
        %v621 = vsub.f32 1.5, %v620
        %v622 = vmul.f32 %v617, %v621
        %vm623 = vweird.f32 %v466
        %vm624 = vweird.f32 %v617
        %vm625 = vmor %vm623, %vm624
        %v626 = vsel %vm625, %v617, %v622
        %v627 = vmul.f32 %v476, %v306
        %v628 = vmul.f32 %v486, %v309
        %v629 = vmul.f32 %v496, %v312
        %v630 = vmul.f32 %v506, %v315
        %v631 = vmul.f32 %v516, %v318
        %v632 = vmul.f32 %v526, %v321
        %v633 = vmul.f32 %v536, %v324
        %v634 = vmul.f32 %v546, %v327
        %v635 = vmul.f32 %v556, %v330
        %v636 = vmul.f32 %v566, %v333
        %v637 = vmul.f32 %v576, %v336
        %v638 = vmul.f32 %v586, %v339
        %v639 = vmul.f32 %v596, %v342
        %v640 = vmul.f32 %v606, %v345
        %v641 = vmul.f32 %v616, %v348
        %v642 = vmul.f32 %v626, %v351
        %v644 = vsel %vm386, %v370, 0
        %646 = vmatpush.msra.mxu0 0.0
        %647 = vmatpush.msra.mxu0 0.0
        %648 = vmatpush.msra.mxu0 0.0
        %649 = vmatpush.msra.mxu0 0.0
        %650 = vmatpush.msra.mxu0 0.0
        %651 = vmatpush.msra.mxu0 0.0
        %652 = vmatpush.msra.mxu0 0.0
        %653 = vmatpush.msra.mxu0 0.0
        %654 = vmatpush.msra.mxu0 0.0
        %655 = vmatpush.msra.mxu0 0.0
        %656 = vmatpush.msra.mxu0 0.0
        %657 = vmatpush.msra.mxu0 0.0
        %658 = vmatpush.msra.mxu0 0.0
        %659 = vmatpush.msra.mxu0 0.0
        %660 = vmatpush.msra.mxu0 0.0
        %661 = vmatpush.msra.mxu0 %v627
        %662 = vmatmul.f32.gmra.mxu0 %v644
        %v663 = vpop.f32.mrf.mxu0
        %v664 = vadd.f32 %v627, %v663
        %665 = vdwg.mxu0
        %v667 = vsel %vm386, %v371, 0
        %669 = vmatpush.msra.mxu0 0.0
        %670 = vmatpush.msra.mxu0 0.0
        %671 = vmatpush.msra.mxu0 0.0
        %672 = vmatpush.msra.mxu0 0.0
        %673 = vmatpush.msra.mxu0 0.0
        %674 = vmatpush.msra.mxu0 0.0
        %675 = vmatpush.msra.mxu0 0.0
        %676 = vmatpush.msra.mxu0 0.0
        %677 = vmatpush.msra.mxu0 0.0
        %678 = vmatpush.msra.mxu0 0.0
        %679 = vmatpush.msra.mxu0 0.0
        %680 = vmatpush.msra.mxu0 0.0
        %681 = vmatpush.msra.mxu0 0.0
        %682 = vmatpush.msra.mxu0 0.0
        %683 = vmatpush.msra.mxu0 0.0
        %684 = vmatpush.msra.mxu0 %v628
        %685 = vmatmul.f32.gmra.mxu0 %v667
        %v686 = vpop.f32.mrf.mxu0
        %v687 = vadd.f32 %v628, %v686
        %688 = vdwg.mxu0
        %v690 = vsel %vm386, %v372, 0
        %692 = vmatpush.msra.mxu0 0.0
        %693 = vmatpush.msra.mxu0 0.0
        %694 = vmatpush.msra.mxu0 0.0
        %695 = vmatpush.msra.mxu0 0.0
        %696 = vmatpush.msra.mxu0 0.0
        %697 = vmatpush.msra.mxu0 0.0
        %698 = vmatpush.msra.mxu0 0.0
        %699 = vmatpush.msra.mxu0 0.0
        %700 = vmatpush.msra.mxu0 0.0
        %701 = vmatpush.msra.mxu0 0.0
        %702 = vmatpush.msra.mxu0 0.0
        %703 = vmatpush.msra.mxu0 0.0
        %704 = vmatpush.msra.mxu0 0.0
        %705 = vmatpush.msra.mxu0 0.0
        %706 = vmatpush.msra.mxu0 0.0
        %707 = vmatpush.msra.mxu0 %v629
        %708 = vmatmul.f32.gmra.mxu0 %v690
        %v709 = vpop.f32.mrf.mxu0
        %v710 = vadd.f32 %v629, %v709
        %711 = vdwg.mxu0
        %v713 = vsel %vm386, %v373, 0
        %715 = vmatpush.msra.mxu0 0.0
        %716 = vmatpush.msra.mxu0 0.0
        %717 = vmatpush.msra.mxu0 0.0
        %718 = vmatpush.msra.mxu0 0.0
        %719 = vmatpush.msra.mxu0 0.0
        %720 = vmatpush.msra.mxu0 0.0
        %721 = vmatpush.msra.mxu0 0.0
        %722 = vmatpush.msra.mxu0 0.0
        %723 = vmatpush.msra.mxu0 0.0
        %724 = vmatpush.msra.mxu0 0.0
        %725 = vmatpush.msra.mxu0 0.0
        %726 = vmatpush.msra.mxu0 0.0
        %727 = vmatpush.msra.mxu0 0.0
        %728 = vmatpush.msra.mxu0 0.0
        %729 = vmatpush.msra.mxu0 0.0
        %730 = vmatpush.msra.mxu0 %v630
        %731 = vmatmul.f32.gmra.mxu0 %v713
        %v732 = vpop.f32.mrf.mxu0
        %v733 = vadd.f32 %v630, %v732
        %734 = vdwg.mxu0
        %v736 = vsel %vm386, %v374, 0
        %738 = vmatpush.msra.mxu0 0.0
        %739 = vmatpush.msra.mxu0 0.0
        %740 = vmatpush.msra.mxu0 0.0
        %741 = vmatpush.msra.mxu0 0.0
        %742 = vmatpush.msra.mxu0 0.0
        %743 = vmatpush.msra.mxu0 0.0
        %744 = vmatpush.msra.mxu0 0.0
        %745 = vmatpush.msra.mxu0 0.0
        %746 = vmatpush.msra.mxu0 0.0
        %747 = vmatpush.msra.mxu0 0.0
        %748 = vmatpush.msra.mxu0 0.0
        %749 = vmatpush.msra.mxu0 0.0
        %750 = vmatpush.msra.mxu0 0.0
        %751 = vmatpush.msra.mxu0 0.0
        %752 = vmatpush.msra.mxu0 0.0
        %753 = vmatpush.msra.mxu0 %v631
        %754 = vmatmul.f32.gmra.mxu0 %v736
        %v755 = vpop.f32.mrf.mxu0
        %v756 = vadd.f32 %v631, %v755
        %757 = vdwg.mxu0
        %v759 = vsel %vm386, %v375, 0
        %761 = vmatpush.msra.mxu0 0.0
        %762 = vmatpush.msra.mxu0 0.0
        %763 = vmatpush.msra.mxu0 0.0
        %764 = vmatpush.msra.mxu0 0.0
        %765 = vmatpush.msra.mxu0 0.0
        %766 = vmatpush.msra.mxu0 0.0
        %767 = vmatpush.msra.mxu0 0.0
        %768 = vmatpush.msra.mxu0 0.0
        %769 = vmatpush.msra.mxu0 0.0
        %770 = vmatpush.msra.mxu0 0.0
        %771 = vmatpush.msra.mxu0 0.0
        %772 = vmatpush.msra.mxu0 0.0
        %773 = vmatpush.msra.mxu0 0.0
        %774 = vmatpush.msra.mxu0 0.0
        %775 = vmatpush.msra.mxu0 0.0
        %776 = vmatpush.msra.mxu0 %v632
        %777 = vmatmul.f32.gmra.mxu0 %v759
        %v778 = vpop.f32.mrf.mxu0
        %v779 = vadd.f32 %v632, %v778
        %780 = vdwg.mxu0
        %v782 = vsel %vm386, %v376, 0
        %784 = vmatpush.msra.mxu0 0.0
        %785 = vmatpush.msra.mxu0 0.0
        %786 = vmatpush.msra.mxu0 0.0
        %787 = vmatpush.msra.mxu0 0.0
        %788 = vmatpush.msra.mxu0 0.0
        %789 = vmatpush.msra.mxu0 0.0
        %790 = vmatpush.msra.mxu0 0.0
        %791 = vmatpush.msra.mxu0 0.0
        %792 = vmatpush.msra.mxu0 0.0
        %793 = vmatpush.msra.mxu0 0.0
        %794 = vmatpush.msra.mxu0 0.0
        %795 = vmatpush.msra.mxu0 0.0
        %796 = vmatpush.msra.mxu0 0.0
        %797 = vmatpush.msra.mxu0 0.0
        %798 = vmatpush.msra.mxu0 0.0
        %799 = vmatpush.msra.mxu0 %v633
        %800 = vmatmul.f32.gmra.mxu0 %v782
        %v801 = vpop.f32.mrf.mxu0
        %v802 = vadd.f32 %v633, %v801
        %803 = vdwg.mxu0
        %v805 = vsel %vm386, %v377, 0
        %807 = vmatpush.msra.mxu0 0.0
        %808 = vmatpush.msra.mxu0 0.0
        %809 = vmatpush.msra.mxu0 0.0
        %810 = vmatpush.msra.mxu0 0.0
        %811 = vmatpush.msra.mxu0 0.0
        %812 = vmatpush.msra.mxu0 0.0
        %813 = vmatpush.msra.mxu0 0.0
        %814 = vmatpush.msra.mxu0 0.0
        %815 = vmatpush.msra.mxu0 0.0
        %816 = vmatpush.msra.mxu0 0.0
        %817 = vmatpush.msra.mxu0 0.0
        %818 = vmatpush.msra.mxu0 0.0
        %819 = vmatpush.msra.mxu0 0.0
        %820 = vmatpush.msra.mxu0 0.0
        %821 = vmatpush.msra.mxu0 0.0
        %822 = vmatpush.msra.mxu0 %v634
        %823 = vmatmul.f32.gmra.mxu0 %v805
        %v824 = vpop.f32.mrf.mxu0
        %v825 = vadd.f32 %v634, %v824
        %826 = vdwg.mxu0
        %v828 = vsel %vm386, %v378, 0
        %830 = vmatpush.msra.mxu0 0.0
        %831 = vmatpush.msra.mxu0 0.0
        %832 = vmatpush.msra.mxu0 0.0
        %833 = vmatpush.msra.mxu0 0.0
        %834 = vmatpush.msra.mxu0 0.0
        %835 = vmatpush.msra.mxu0 0.0
        %836 = vmatpush.msra.mxu0 0.0
        %837 = vmatpush.msra.mxu0 0.0
        %838 = vmatpush.msra.mxu0 0.0
        %839 = vmatpush.msra.mxu0 0.0
        %840 = vmatpush.msra.mxu0 0.0
        %841 = vmatpush.msra.mxu0 0.0
        %842 = vmatpush.msra.mxu0 0.0
        %843 = vmatpush.msra.mxu0 0.0
        %844 = vmatpush.msra.mxu0 0.0
        %845 = vmatpush.msra.mxu0 %v635
        %846 = vmatmul.f32.gmra.mxu0 %v828
        %v847 = vpop.f32.mrf.mxu0
        %v848 = vadd.f32 %v635, %v847
        %849 = vdwg.mxu0
        %v851 = vsel %vm386, %v379, 0
        %853 = vmatpush.msra.mxu0 0.0
        %854 = vmatpush.msra.mxu0 0.0
        %855 = vmatpush.msra.mxu0 0.0
        %856 = vmatpush.msra.mxu0 0.0
        %857 = vmatpush.msra.mxu0 0.0
        %858 = vmatpush.msra.mxu0 0.0
        %859 = vmatpush.msra.mxu0 0.0
        %860 = vmatpush.msra.mxu0 0.0
        %861 = vmatpush.msra.mxu0 0.0
        %862 = vmatpush.msra.mxu0 0.0
        %863 = vmatpush.msra.mxu0 0.0
        %864 = vmatpush.msra.mxu0 0.0
        %865 = vmatpush.msra.mxu0 0.0
        %866 = vmatpush.msra.mxu0 0.0
        %867 = vmatpush.msra.mxu0 0.0
        %868 = vmatpush.msra.mxu0 %v636
        %869 = vmatmul.f32.gmra.mxu0 %v851
        %v870 = vpop.f32.mrf.mxu0
        %v871 = vadd.f32 %v636, %v870
        %872 = vdwg.mxu0
        %v874 = vsel %vm386, %v380, 0
        %876 = vmatpush.msra.mxu0 0.0
        %877 = vmatpush.msra.mxu0 0.0
        %878 = vmatpush.msra.mxu0 0.0
        %879 = vmatpush.msra.mxu0 0.0
        %880 = vmatpush.msra.mxu0 0.0
        %881 = vmatpush.msra.mxu0 0.0
        %882 = vmatpush.msra.mxu0 0.0
        %883 = vmatpush.msra.mxu0 0.0
        %884 = vmatpush.msra.mxu0 0.0
        %885 = vmatpush.msra.mxu0 0.0
        %886 = vmatpush.msra.mxu0 0.0
        %887 = vmatpush.msra.mxu0 0.0
        %888 = vmatpush.msra.mxu0 0.0
        %889 = vmatpush.msra.mxu0 0.0
        %890 = vmatpush.msra.mxu0 0.0
        %891 = vmatpush.msra.mxu0 %v637
        %892 = vmatmul.f32.gmra.mxu0 %v874
        %v893 = vpop.f32.mrf.mxu0
        %v894 = vadd.f32 %v637, %v893
        %895 = vdwg.mxu0
        %v897 = vsel %vm386, %v381, 0
        %899 = vmatpush.msra.mxu0 0.0
        %900 = vmatpush.msra.mxu0 0.0
        %901 = vmatpush.msra.mxu0 0.0
        %902 = vmatpush.msra.mxu0 0.0
        %903 = vmatpush.msra.mxu0 0.0
        %904 = vmatpush.msra.mxu0 0.0
        %905 = vmatpush.msra.mxu0 0.0
        %906 = vmatpush.msra.mxu0 0.0
        %907 = vmatpush.msra.mxu0 0.0
        %908 = vmatpush.msra.mxu0 0.0
        %909 = vmatpush.msra.mxu0 0.0
        %910 = vmatpush.msra.mxu0 0.0
        %911 = vmatpush.msra.mxu0 0.0
        %912 = vmatpush.msra.mxu0 0.0
        %913 = vmatpush.msra.mxu0 0.0
        %914 = vmatpush.msra.mxu0 %v638
        %915 = vmatmul.f32.gmra.mxu0 %v897
        %v916 = vpop.f32.mrf.mxu0
        %v917 = vadd.f32 %v638, %v916
        %918 = vdwg.mxu0
        %v920 = vsel %vm386, %v382, 0
        %922 = vmatpush.msra.mxu0 0.0
        %923 = vmatpush.msra.mxu0 0.0
        %924 = vmatpush.msra.mxu0 0.0
        %925 = vmatpush.msra.mxu0 0.0
        %926 = vmatpush.msra.mxu0 0.0
        %927 = vmatpush.msra.mxu0 0.0
        %928 = vmatpush.msra.mxu0 0.0
        %929 = vmatpush.msra.mxu0 0.0
        %930 = vmatpush.msra.mxu0 0.0
        %931 = vmatpush.msra.mxu0 0.0
        %932 = vmatpush.msra.mxu0 0.0
        %933 = vmatpush.msra.mxu0 0.0
        %934 = vmatpush.msra.mxu0 0.0
        %935 = vmatpush.msra.mxu0 0.0
        %936 = vmatpush.msra.mxu0 0.0
        %937 = vmatpush.msra.mxu0 %v639
        %938 = vmatmul.f32.gmra.mxu0 %v920
        %v939 = vpop.f32.mrf.mxu0
        %v940 = vadd.f32 %v639, %v939
        %941 = vdwg.mxu0
        %v943 = vsel %vm386, %v383, 0
        %945 = vmatpush.msra.mxu0 0.0
        %946 = vmatpush.msra.mxu0 0.0
        %947 = vmatpush.msra.mxu0 0.0
        %948 = vmatpush.msra.mxu0 0.0
        %949 = vmatpush.msra.mxu0 0.0
        %950 = vmatpush.msra.mxu0 0.0
        %951 = vmatpush.msra.mxu0 0.0
        %952 = vmatpush.msra.mxu0 0.0
        %953 = vmatpush.msra.mxu0 0.0
        %954 = vmatpush.msra.mxu0 0.0
        %955 = vmatpush.msra.mxu0 0.0
        %956 = vmatpush.msra.mxu0 0.0
        %957 = vmatpush.msra.mxu0 0.0
        %958 = vmatpush.msra.mxu0 0.0
        %959 = vmatpush.msra.mxu0 0.0
        %960 = vmatpush.msra.mxu0 %v640
        %961 = vmatmul.f32.gmra.mxu0 %v943
        %v962 = vpop.f32.mrf.mxu0
        %v963 = vadd.f32 %v640, %v962
        %964 = vdwg.mxu0
        %v966 = vsel %vm386, %v384, 0
        %968 = vmatpush.msra.mxu0 0.0
        %969 = vmatpush.msra.mxu0 0.0
        %970 = vmatpush.msra.mxu0 0.0
        %971 = vmatpush.msra.mxu0 0.0
        %972 = vmatpush.msra.mxu0 0.0
        %973 = vmatpush.msra.mxu0 0.0
        %974 = vmatpush.msra.mxu0 0.0
        %975 = vmatpush.msra.mxu0 0.0
        %976 = vmatpush.msra.mxu0 0.0
        %977 = vmatpush.msra.mxu0 0.0
        %978 = vmatpush.msra.mxu0 0.0
        %979 = vmatpush.msra.mxu0 0.0
        %980 = vmatpush.msra.mxu0 0.0
        %981 = vmatpush.msra.mxu0 0.0
        %982 = vmatpush.msra.mxu0 0.0
        %983 = vmatpush.msra.mxu0 %v641
        %984 = vmatmul.f32.gmra.mxu0 %v966
        %v985 = vpop.f32.mrf.mxu0
        %v986 = vadd.f32 %v641, %v985
        %987 = vdwg.mxu0
        %v989 = vsel %vm386, %v385, 0
        %991 = vmatpush.msra.mxu0 0.0
        %992 = vmatpush.msra.mxu0 0.0
        %993 = vmatpush.msra.mxu0 0.0
        %994 = vmatpush.msra.mxu0 0.0
        %995 = vmatpush.msra.mxu0 0.0
        %996 = vmatpush.msra.mxu0 0.0
        %997 = vmatpush.msra.mxu0 0.0
        %998 = vmatpush.msra.mxu0 0.0
        %999 = vmatpush.msra.mxu0 0.0
        %1000 = vmatpush.msra.mxu0 0.0
        %1001 = vmatpush.msra.mxu0 0.0
        %1002 = vmatpush.msra.mxu0 0.0
        %1003 = vmatpush.msra.mxu0 0.0
        %1004 = vmatpush.msra.mxu0 0.0
        %1005 = vmatpush.msra.mxu0 0.0
        %1006 = vmatpush.msra.mxu0 %v642
        %1007 = vmatmul.f32.gmra.mxu0 %v989
        %v1008 = vpop.f32.mrf.mxu0
        %v1009 = vadd.f32 %v642, %v1008
        %1010 = vdwg.mxu0
        %v1011 = vmul.f32 %v476, %v664
        %v1012 = vmul.f32 %v486, %v687
        %v1013 = vmul.f32 %v496, %v710
        %v1014 = vmul.f32 %v506, %v733
        %v1015 = vmul.f32 %v516, %v756
        %v1016 = vmul.f32 %v526, %v779
        %v1017 = vmul.f32 %v536, %v802
        %v1018 = vmul.f32 %v546, %v825
        %v1019 = vmul.f32 %v556, %v848
        %v1020 = vmul.f32 %v566, %v871
        %v1021 = vmul.f32 %v576, %v894
        %v1022 = vmul.f32 %v586, %v917
        %v1023 = vmul.f32 %v596, %v940
        %v1024 = vmul.f32 %v606, %v963
        %v1025 = vmul.f32 %v616, %v986
        %v1026 = vmul.f32 %v626, %v1009
        %vm1027 = vcmask 261120
        %1028 = vst.msk [vmem:[%s207] sm:$0xff] %vm1027, %v1011
        %1029 = vst.msk [vmem:[%s207 + $0x8] sm:$0xff] %vm1027, %v1012
        %1030 = vst.msk [vmem:[%s207 + $0x10] sm:$0xff] %vm1027, %v1013
        %1031 = vst.msk [vmem:[%s207 + $0x18] sm:$0xff] %vm1027, %v1014
        %1032 = vst.msk [vmem:[%s207 + $0x20] sm:$0xff] %vm1027, %v1015
        %1033 = vst.msk [vmem:[%s207 + $0x28] sm:$0xff] %vm1027, %v1016
        %1034 = vst.msk [vmem:[%s207 + $0x30] sm:$0xff] %vm1027, %v1017
        %1035 = vst.msk [vmem:[%s207 + $0x38] sm:$0xff] %vm1027, %v1018
        %1036 = vst.msk [vmem:[%s207 + $0x40] sm:$0xff] %vm1027, %v1019
        %1037 = vst.msk [vmem:[%s207 + $0x48] sm:$0xff] %vm1027, %v1020
        %1038 = vst.msk [vmem:[%s207 + $0x50] sm:$0xff] %vm1027, %v1021
        %1039 = vst.msk [vmem:[%s207 + $0x58] sm:$0xff] %vm1027, %v1022
        %1040 = vst.msk [vmem:[%s207 + $0x60] sm:$0xff] %vm1027, %v1023
        %1041 = vst.msk [vmem:[%s207 + $0x68] sm:$0xff] %vm1027, %v1024
        %1042 = vst.msk [vmem:[%s207 + $0x70] sm:$0xff] %vm1027, %v1025
        %1043 = vst.msk [vmem:[%s207 + $0x78] sm:$0xff] %vm1027, %v1026
        %s1044 = sand.u32 %s120, 1
        %s1045 = scalar_lea.sflag [#allocation3], %s1044
        %s1046 = sand.u32 %s120, 1
        %s1047 = smul.addr %s1046, 128
        %s1048 = scalar_lea.vmem [#allocation2], %s1047
        // Predicated region
        $region37: #{tpu_custom_call.1} parent=35 // pred_check
          %p1049 = pneg %p130
        $region38: #{tpu_custom_call.1} parent=35 // pred_check_branch
          %1051 = sbr.rel (%p1049) target = $region40
        $region39: #{tpu_custom_call.1} parent=35 // pred_region
          %s1052 = smul.u32 16, %s18
          %1054 = vsyncadd %s1045, 0
          %s1055 = smul.addr %s1052, 8
          %s1056 = scalar_lea.hbm %s4, %s1055
          %s1057 = sshll.u32 %s1048, 4
          %s1058 = int_to_ptr.vmem [resolvable:$true] %s1057
          %s1059 = sshll.u32 %s1056, 4
          %s1060 = int_to_ptr.hbm [resolvable:$true] %s1059
          %1065 = dma.vmem_to_hbm [thread:$0]  %s1058, 2048, %s1060, %s1045, 128, 128, 8
        $region40: #{tpu_custom_call.1} parent=35 // pred_fallthru
          _
      $region36: #{tpu_custom_call.1} parent=5 // pred_fallthru
        _
      %p1066 = scmp.le.s32.totalorder 2, %s13
      // Predicated region
      $region41: #{tpu_custom_call.1} parent=5 // pred_check
        %p1067 = pneg %p1066
      $region42: #{tpu_custom_call.1} parent=5 // pred_check_branch
        %1069 = sbr.rel (%p1067) target = $region44
      $region43: #{tpu_custom_call.1} parent=5 // pred_region
        %s1070 = ssub.s32 %s13, 2
        // Predicated region
        $region45: #{tpu_custom_call.1} parent=43 // pred_check
          %p1071 = pneg %p136
        $region46: #{tpu_custom_call.1} parent=43 // pred_check_branch
          %1073 = sbr.rel (%p1071) target = $region48
        $region47: #{tpu_custom_call.1} parent=43 // pred_region
          %s1074 = sand.u32 %s121, 1
          %s1075 = scalar_lea.sflag [#allocation3], %s1074
          %s1076 = sand.u32 %s121, 1
          %s1077 = smul.addr %s1076, 128
          %s1078 = scalar_lea.vmem [#allocation2], %s1077
          %1080 = dma.done %s1075, 2048
        $region48: #{tpu_custom_call.1} parent=43 // pred_fallthru
          _
      $region44: #{tpu_custom_call.1} parent=5 // pred_fallthru
        _
    $region6: #{tpu_custom_call.1} parent=1 // loop_footer
      %s17 = sadd.s32 1, %s13
    $region7: #{tpu_custom_call.1} parent=1 // loop_footer_branch
      %12 = sbr.rel target = $region3
    $region8: #{tpu_custom_call.1} parent=1 // loop_exit
      _
    %1081 = vsyncpa [#allocation3], 1
    %s1082 = scalar_lea.sflag [#allocation3], 1
    %1083 = vsyncpa %s1082, 1

</llo_original>
